<compile_context>
chip_gen: v7x
topology: tpu7x:2x2x1
jax: 0.10.0
libtpu: 0.0.40
codegen_flags: <defaults>
</compile_context>

<pallas_src>
import functools

import jax
import jax.numpy as jnp
from jax.experimental import pallas as pl
from jax.experimental.pallas import tpu as pltpu


def _decoder_kernel(z_ref, y_ref, w2a_ref, w2b_ref, b2_ref, w1_ref, b1_ref, o_ref):
    # z_ref  : [bm, latent]      y_ref  : [bm, cond]
    # w2a_ref: [latent, 128]     w2b_ref: [cond, 128]     b2_ref: [1, 128] (f32)
    # w1_ref : [128, tn]         b1_ref : [1, tn]   (f32)
    # o_ref  : [bm, tn]          (f32)
    #
    # Fused concat: concat(z, y) @ W2 == z @ W2[:latent] + y @ W2[latent:]
    h = jnp.dot(z_ref[...], w2a_ref[...], preferred_element_type=jnp.float32)
    h = h + jnp.dot(y_ref[...], w2b_ref[...], preferred_element_type=jnp.float32)
    h = jnp.maximum(h + b2_ref[...], 0.0)          # f32 bias-add + relu epilogue
    h = h.astype(w1_ref.dtype)                     # bf16 MXU operand on bf16 path
    out = jnp.dot(h, w1_ref[...], preferred_element_type=jnp.float32) + b1_ref[...]
    o_ref[...] = out.astype(o_ref.dtype)


def _round_up(x, m):
    return (x + m - 1) // m * m


@functools.partial(jax.jit, static_argnames=("use_bf16", "bm_max", "tn_max"))
def linear_decoder_forward(z, y, params, *, use_bf16=False, bm_max=512, tn_max=512):
    """Pallas implementation of LinearDecoder.forward.

    z : [B, latent_dim], y : [B, cond_dim]
    params: w2 [latent+cond, 128], b2 [128], w1 [128, input_dim], b1 [input_dim]
            (weights stored transposed vs. PyTorch, i.e. [in, out])
    returns x : [B, input_dim] float32
    """
    batch, latent_dim = z.shape
    cond_dim = y.shape[1]
    w2, b2, w1, b1 = params["w2"], params["b2"], params["w1"], params["b1"]
    hidden = w2.shape[1]
    input_dim = w1.shape[1]

    # Split W2 so the concat is fused into the kernel (no z_cond materialized).
    w2a, w2b = w2[:latent_dim], w2[latent_dim:]

    compute_dtype = jnp.bfloat16 if use_bf16 else jnp.float32
    z_c = z.astype(compute_dtype)
    y_c = y.astype(compute_dtype)
    w2a_c = w2a.astype(compute_dtype)
    w2b_c = w2b.astype(compute_dtype)
    w1_c = w1.astype(compute_dtype)
    b2_r = b2.reshape(1, hidden).astype(jnp.float32)   # epilogue stays f32
    b1_r = b1.reshape(1, input_dim).astype(jnp.float32)

    # Tile sizes: batch tile multiple of 8 (sublane), output tile lane-dense
    # multiple of 128 (up to 512). Pad ragged dims in the wrapper.
    bm = min(bm_max, _round_up(batch, 8))
    tn = min(tn_max, _round_up(input_dim, 128))
    b_pad = _round_up(batch, bm)
    n_pad = _round_up(input_dim, tn)

    if b_pad != batch:
        z_c = jnp.pad(z_c, ((0, b_pad - batch), (0, 0)))
        y_c = jnp.pad(y_c, ((0, b_pad - batch), (0, 0)))
    if n_pad != input_dim:
        w1_c = jnp.pad(w1_c, ((0, 0), (0, n_pad - input_dim)))
        b1_r = jnp.pad(b1_r, ((0, 0), (0, n_pad - input_dim)))

    grid = (b_pad // bm, n_pad // tn)

    # Rough double-buffered VMEM need -> explicit, conservative limit that is
    # portable to v7x's smaller (64 MiB) VMEM.
    est = 4 * (
        2 * bm * (latent_dim + cond_dim)        # z + y tiles
        + (latent_dim + cond_dim) * hidden      # W2a + W2b (resident)
        + hidden                                # b2
        + hidden * tn + tn                      # W1 tile + b1 tile
        + bm * tn                               # out tile
        + bm * hidden                           # h intermediate
    ) * 2
    vmem_limit = int(min(max(2 * est, 4 << 20), 32 << 20))

    out = pl.pallas_call(
        _decoder_kernel,
        out_shape=jax.ShapeDtypeStruct((b_pad, n_pad), jnp.float32),
        grid=grid,
        in_specs=[
            pl.BlockSpec((bm, latent_dim), lambda i, j: (i, 0)),       # z
            pl.BlockSpec((bm, cond_dim), lambda i, j: (i, 0)),         # y
            pl.BlockSpec((latent_dim, hidden), lambda i, j: (0, 0)),   # W2a (resident)
            pl.BlockSpec((cond_dim, hidden), lambda i, j: (0, 0)),     # W2b (resident)
            pl.BlockSpec((1, hidden), lambda i, j: (0, 0)),            # b2  (resident)
            pl.BlockSpec((hidden, tn), lambda i, j: (0, j)),           # W1 tile
            pl.BlockSpec((1, tn), lambda i, j: (0, j)),                # b1 tile
        ],
        out_specs=pl.BlockSpec((bm, tn), lambda i, j: (i, j)),
        compiler_params=pltpu.CompilerParams(
            dimension_semantics=("parallel", "parallel"),
            vmem_limit_bytes=vmem_limit,
        ),
    )(z_c, y_c, w2a_c, w2b_c, b2_r, w1_c, b1_r)

    return out[:batch, :input_dim]


def init_params(key, input_dim, latent_dim=32, cond_dim=32):
    """PyTorch-Linear-like uniform init, weights stored as [in, out]."""
    k1, k2, k3, k4 = jax.random.split(key, 4)
    in2 = latent_dim + cond_dim
    bound2 = 1.0 / jnp.sqrt(in2)
    bound1 = 1.0 / jnp.sqrt(128.0)
    return {
        "w2": jax.random.uniform(k1, (in2, 128), jnp.float32, -bound2, bound2),
        "b2": jax.random.uniform(k2, (128,), jnp.float32, -bound2, bound2),
        "w1": jax.random.uniform(k3, (128, input_dim), jnp.float32, -bound1, bound1),
        "b1": jax.random.uniform(k4, (input_dim,), jnp.float32, -bound1, bound1),
    }


def _reference(z, y, params):
    zc = jnp.concatenate([z, y], axis=-1)
    h = jnp.maximum(zc @ params["w2"] + params["b2"], 0.0)
    return h @ params["w1"] + params["b1"]


if __name__ == "__main__":
    key = jax.random.PRNGKey(0)
    k_z, k_y, k_p = jax.random.split(key, 3)

    # Small, module-consistent shapes.
    batch, latent_dim, cond_dim, input_dim = 8, 32, 32, 256
    z = jax.random.normal(k_z, (batch, latent_dim), jnp.float32)
    y = jax.random.normal(k_y, (batch, cond_dim), jnp.float32)
    params = init_params(k_p, input_dim, latent_dim, cond_dim)

    # f32 path: exact vs. reference.
    out = jax.block_until_ready(linear_decoder_forward(z, y, params))
    ref = _reference(z, y, params)
    assert out.shape == (batch, input_dim), out.shape
    assert jnp.allclose(out, ref, atol=1e-4, rtol=1e-4), "f32 mismatch vs. reference"

    # Ragged shapes exercise the wrapper padding / slicing path.
    batch2, input_dim2 = 13, 200
    z2 = jax.random.normal(k_z, (batch2, latent_dim), jnp.float32)
    y2 = jax.random.normal(k_y, (batch2, cond_dim), jnp.float32)
    params2 = init_params(k_p, input_dim2, latent_dim, cond_dim)
    out2 = jax.block_until_ready(linear_decoder_forward(z2, y2, params2))
    ref2 = _reference(z2, y2, params2)
    assert out2.shape == (batch2, input_dim2), out2.shape
    assert jnp.allclose(out2, ref2, atol=1e-4, rtol=1e-4), "ragged mismatch vs. reference"

    # bf16 MXU path (v6e/v7x optimization): f32 accumulate, loose tolerance.
    out_bf16 = jax.block_until_ready(linear_decoder_forward(z, y, params, use_bf16=True))
    assert out_bf16.shape == (batch, input_dim)
    assert jnp.allclose(out_bf16, ref, atol=1e-1, rtol=1e-1), "bf16 path mismatch"

    print("KERNEL_OK")
</pallas_src>

<mosaic_0001>
module attributes {stable_mosaic.version = 11 : i64} {
  func.func @_decoder_kernel(%arg0: i32, %arg1: i32, %arg2: memref<8x32xf32, #tpu.memory_space<vmem>>, %arg3: memref<8x32xf32, #tpu.memory_space<vmem>>, %arg4: memref<32x128xf32, #tpu.memory_space<vmem>>, %arg5: memref<32x128xf32, #tpu.memory_space<vmem>>, %arg6: memref<1x128xf32, #tpu.memory_space<vmem>>, %arg7: memref<128x256xf32, #tpu.memory_space<vmem>>, %arg8: memref<1x256xf32, #tpu.memory_space<vmem>>, %arg9: memref<8x256xf32, #tpu.memory_space<vmem>>) attributes {dimension_semantics = [#tpu.dimension_semantics<parallel>, #tpu.dimension_semantics<parallel>], iteration_bounds = array<i64: 1, 1>, scalar_prefetch = 0 : i64, scratch_operands = 0 : i64, tpu.core_type = #tpu.core_type<tc>, window_params = [{transform_indices = @transform_0, window_bounds = array<i64: 8, 32>}, {transform_indices = @transform_1, window_bounds = array<i64: 8, 32>}, {pipeline_mode = #tpu.pipeline_mode<synchronous>, transform_indices = @transform_2, window_bounds = array<i64: 32, 128>}, {pipeline_mode = #tpu.pipeline_mode<synchronous>, transform_indices = @transform_3, window_bounds = array<i64: 32, 128>}, {pipeline_mode = #tpu.pipeline_mode<synchronous>, transform_indices = @transform_4, window_bounds = array<i64: 1, 128>}, {transform_indices = @transform_5, window_bounds = array<i64: 128, 256>}, {transform_indices = @transform_6, window_bounds = array<i64: 1, 256>}, {transform_indices = @transform_7, window_bounds = array<i64: 8, 256>}]} {
    %c0 = arith.constant 0 : index
    %c0_0 = arith.constant 0 : index
    %0 = vector.load %arg2[%c0, %c0_0] : memref<8x32xf32, #tpu.memory_space<vmem>>, vector<8x32xf32>
    %c0_1 = arith.constant 0 : index
    %c0_2 = arith.constant 0 : index
    %1 = vector.load %arg4[%c0_1, %c0_2] : memref<32x128xf32, #tpu.memory_space<vmem>>, vector<32x128xf32>
    %cst = arith.constant dense<0.000000e+00> : vector<8x128xf32>
    %2 = tpu.matmul %0, %1, %cst {dimension_numbers = #tpu.dot_dimension_numbers<[1], [0], [0], [1], [0, 0, 1, 1], [], []>} : vector<8x32xf32>, vector<32x128xf32>, vector<8x128xf32> -> vector<8x128xf32>
    %c0_3 = arith.constant 0 : index
    %c0_4 = arith.constant 0 : index
    %3 = vector.load %arg3[%c0_3, %c0_4] : memref<8x32xf32, #tpu.memory_space<vmem>>, vector<8x32xf32>
    %c0_5 = arith.constant 0 : index
    %c0_6 = arith.constant 0 : index
    %4 = vector.load %arg5[%c0_5, %c0_6] : memref<32x128xf32, #tpu.memory_space<vmem>>, vector<32x128xf32>
    %cst_7 = arith.constant dense<0.000000e+00> : vector<8x128xf32>
    %5 = tpu.matmul %3, %4, %cst_7 {dimension_numbers = #tpu.dot_dimension_numbers<[1], [0], [0], [1], [0, 0, 1, 1], [], []>} : vector<8x32xf32>, vector<32x128xf32>, vector<8x128xf32> -> vector<8x128xf32>
    %6 = arith.addf %2, %5 : vector<8x128xf32>
    %c0_8 = arith.constant 0 : index
    %c0_9 = arith.constant 0 : index
    %7 = vector.load %arg6[%c0_8, %c0_9] : memref<1x128xf32, #tpu.memory_space<vmem>>, vector<1x128xf32>
    %8 = vector.broadcast %7 : vector<1x128xf32> to vector<8x128xf32>
    %9 = arith.addf %6, %8 : vector<8x128xf32>
    %cst_10 = arith.constant 0.000000e+00 : f32
    %10 = vector.broadcast %cst_10 : f32 to vector<8x128xf32>
    %11 = arith.maximumf %9, %10 : vector<8x128xf32>
    %c0_11 = arith.constant 0 : index
    %c0_12 = arith.constant 0 : index
    %12 = vector.load %arg7[%c0_11, %c0_12] : memref<128x256xf32, #tpu.memory_space<vmem>>, vector<128x256xf32>
    %cst_13 = arith.constant dense<0.000000e+00> : vector<8x256xf32>
    %13 = tpu.matmul %11, %12, %cst_13 {dimension_numbers = #tpu.dot_dimension_numbers<[1], [0], [0], [1], [0, 0, 1, 1], [], []>} : vector<8x128xf32>, vector<128x256xf32>, vector<8x256xf32> -> vector<8x256xf32>
    %c0_14 = arith.constant 0 : index
    %c0_15 = arith.constant 0 : index
    %14 = vector.load %arg8[%c0_14, %c0_15] : memref<1x256xf32, #tpu.memory_space<vmem>>, vector<1x256xf32>
    %15 = vector.broadcast %14 : vector<1x256xf32> to vector<8x256xf32>
    %16 = arith.addf %13, %15 : vector<8x256xf32>
    %c0_16 = arith.constant 0 : index
    %c0_17 = arith.constant 0 : index
    %17 = vector.load %arg9[%c0_16, %c0_17] : memref<8x256xf32, #tpu.memory_space<vmem>>, vector<8x256xf32>
    tpu.vector_store %arg9[%c0_16, %c0_17], %16 {strides = array<i32>} : memref<8x256xf32, #tpu.memory_space<vmem>>, vector<8x256xf32>,
    return
  }
  func.func @transform_0(%arg0: i32, %arg1: i32) -> (i32, i32) {
    %c0_i32 = arith.constant 0 : i32
    %c0_i32_0 = arith.constant 0 : i32
    return %arg0, %c0_i32 : i32, i32
  }
  func.func @transform_1(%arg0: i32, %arg1: i32) -> (i32, i32) {
    %c0_i32 = arith.constant 0 : i32
    %c0_i32_0 = arith.constant 0 : i32
    return %arg0, %c0_i32 : i32, i32
  }
  func.func @transform_2(%arg0: i32, %arg1: i32) -> (i32, i32) {
    %c0_i32 = arith.constant 0 : i32
    %c0_i32_0 = arith.constant 0 : i32
    %c0_i32_1 = arith.constant 0 : i32
    return %c0_i32, %c0_i32_0 : i32, i32
  }
  func.func @transform_3(%arg0: i32, %arg1: i32) -> (i32, i32) {
    %c0_i32 = arith.constant 0 : i32
    %c0_i32_0 = arith.constant 0 : i32
    %c0_i32_1 = arith.constant 0 : i32
    return %c0_i32, %c0_i32_0 : i32, i32
  }
  func.func @transform_4(%arg0: i32, %arg1: i32) -> (i32, i32) {
    %c0_i32 = arith.constant 0 : i32
    %c0_i32_0 = arith.constant 0 : i32
    %c0_i32_1 = arith.constant 0 : i32
    return %c0_i32, %c0_i32_0 : i32, i32
  }
  func.func @transform_5(%arg0: i32, %arg1: i32) -> (i32, i32) {
    %c0_i32 = arith.constant 0 : i32
    %c0_i32_0 = arith.constant 0 : i32
    return %c0_i32, %arg1 : i32, i32
  }
  func.func @transform_6(%arg0: i32, %arg1: i32) -> (i32, i32) {
    %c0_i32 = arith.constant 0 : i32
    %c0_i32_0 = arith.constant 0 : i32
    return %c0_i32, %arg1 : i32, i32
  }
  func.func @transform_7(%arg0: i32, %arg1: i32) -> (i32, i32) {
    %c0_i32 = arith.constant 0 : i32
    return %arg0, %arg1 : i32, i32
  }
}

</mosaic_0001>

<llo_original>
// kernel: linear_decoder_forward.1
$region0: #{linear_decoder_forward.1}
  #allocation0 [shape = 'u32[]', space=smem, size = 0x4, offset = 0x4, fixed_abs, tag = 'smem constant byte address 0x4 - core index']
  #allocation1 [shape = 'u32[144,128]{1,0:T(1,128)}', space=vmem, size = 0x12000, scoped, tag = 'internal scratch']
  %s0 = inlined_call_operand.vmem [shape: f32[8,32], index: 0, kind: input, shape index: {}]
  %s1 = inlined_call_operand.vmem [shape: f32[8,32], index: 1, kind: input, shape index: {}]
  %s2 = inlined_call_operand.vmem [shape: f32[32,128], index: 2, kind: input, shape index: {}]
  %s3 = inlined_call_operand.vmem [shape: f32[32,128], index: 3, kind: input, shape index: {}]
  %s4 = inlined_call_operand.vmem [shape: f32[1,128], index: 4, kind: input, shape index: {}]
  %s5 = inlined_call_operand.hbm [shape: f32[128,256], index: 5, kind: input, shape index: {}]
  %s6 = inlined_call_operand.vmem [shape: f32[1,256], index: 6, kind: input, shape index: {}]
  %s7 = inlined_call_operand.hbm [shape: f32[8,256], index: 7, kind: output, shape index: {}]
  %s8 = sld [smem:[#allocation0]]
  $region42: #{linear_decoder_forward.1} parent=0
    _
  %s10 = ssub.s32 1, %s8
  %s11 = scalar_select 0, %s10, %s8
  $region1: #{linear_decoder_forward.1} parent=0
    #allocation2 [shape = 'u8[131072]{0}', space=vmem, size = 0x20000, scoped, tag = 'input window, operand 5, single buffered']
    #allocation3 [shape = 's32[1]{0}', space=sflag, size = 0x4, scoped, tag = 'scoped memory for linear_decoder_forward.1']
    #allocation4 [shape = 's32[1]{0}', space=sflag, size = 0x4, scoped, tag = 'scoped memory for linear_decoder_forward.1']
    #allocation5 [shape = 'u8[8192]{0}', space=vmem, size = 0x2000, scoped, tag = 'output window, operand 0, single buffered']
    %12 = vsyncpa [#allocation3], 0
    %13 = vsyncpa [#allocation4], 0
    // Predicated region
    $region2: #{linear_decoder_forward.1} parent=1 // pred_check
      _
    $region3: #{linear_decoder_forward.1} parent=1 // pred_check_branch
      %15 = sbr.rel (0) target = $region5
    $region4: #{linear_decoder_forward.1} parent=1 // pred_region
      _
    $region5: #{linear_decoder_forward.1} parent=1 // pred_fallthru
      _
    // Predicated region
    $region6: #{linear_decoder_forward.1} parent=1 // pred_check
      _
    $region7: #{linear_decoder_forward.1} parent=1 // pred_check_branch
      %17 = sbr.rel (0) target = $region9
    $region8: #{linear_decoder_forward.1} parent=1 // pred_region
      _
    $region9: #{linear_decoder_forward.1} parent=1 // pred_fallthru
      _
    // Predicated region
    $region10: #{linear_decoder_forward.1} parent=1 // pred_check
      _
    $region11: #{linear_decoder_forward.1} parent=1 // pred_check_branch
      %19 = sbr.rel (0) target = $region13
    $region12: #{linear_decoder_forward.1} parent=1 // pred_region
      _
    $region13: #{linear_decoder_forward.1} parent=1 // pred_fallthru
      _
    // Predicated region
    $region14: #{linear_decoder_forward.1} parent=1 // pred_check
      _
    $region15: #{linear_decoder_forward.1} parent=1 // pred_check_branch
      %21 = sbr.rel (0) target = $region17
    $region16: #{linear_decoder_forward.1} parent=1 // pred_region
      _
    $region17: #{linear_decoder_forward.1} parent=1 // pred_fallthru
      _
    // Predicated region
    $region18: #{linear_decoder_forward.1} parent=1 // pred_check
      _
    $region19: #{linear_decoder_forward.1} parent=1 // pred_check_branch
      %23 = sbr.rel (0) target = $region21
    $region20: #{linear_decoder_forward.1} parent=1 // pred_region
      _
    $region21: #{linear_decoder_forward.1} parent=1 // pred_fallthru
      _
    // Predicated region
    $region22: #{linear_decoder_forward.1} parent=1 // pred_check
      _
    $region23: #{linear_decoder_forward.1} parent=1 // pred_check_branch
      %25 = sbr.rel (0) target = $region25
    $region24: #{linear_decoder_forward.1} parent=1 // pred_region
      %s27 = ssub.s32 4096, 4096
      %28 = vsyncadd [#allocation3], %s27
      %s29 = sshll.u32 [#allocation2], 4
      %s30 = int_to_ptr.vmem [resolvable:$true] %s29
      %35 = dma.hbm_to_vmem [thread:$0]  %s5, 4096, %s30, [#allocation3], 256, 256, 16
    $region25: #{linear_decoder_forward.1} parent=1 // pred_fallthru
      _
    // Predicated region
    $region26: #{linear_decoder_forward.1} parent=1 // pred_check
      _
    $region27: #{linear_decoder_forward.1} parent=1 // pred_check_branch
      %37 = sbr.rel (0) target = $region29
    $region28: #{linear_decoder_forward.1} parent=1 // pred_region
      _
    $region29: #{linear_decoder_forward.1} parent=1 // pred_fallthru
      _
    // Predicated region
    $region30: #{linear_decoder_forward.1} parent=1 // pred_check
      _
    $region31: #{linear_decoder_forward.1} parent=1 // pred_check_branch
      %39 = sbr.rel (0) target = $region33
    $region32: #{linear_decoder_forward.1} parent=1 // pred_region
      %40 = dma.done [#allocation3], 4096
    $region33: #{linear_decoder_forward.1} parent=1 // pred_fallthru
      _
    %v41 = vld [vmem:[%s0] sm:$0xff]
    %v42 = vld [vmem:[%s2] sm:$0xff]
    %v43 = vld [vmem:[%s2 + $0x8] sm:$0xff]
    %v44 = vld [vmem:[%s2 + $0x10] sm:$0xff]
    %v45 = vld [vmem:[%s2 + $0x18] sm:$0xff]
    %v46 = vld [vmem:[%s1] sm:$0xff]
    %v47 = vld [vmem:[%s3] sm:$0xff]
    %v48 = vld [vmem:[%s3 + $0x8] sm:$0xff]
    %v49 = vld [vmem:[%s3 + $0x10] sm:$0xff]
    %v50 = vld [vmem:[%s3 + $0x18] sm:$0xff]
    %vm51 = vcmask 261120
    %v53 = vsel %vm51, %v46, 0
    %55 = vmatprep.subr.mxu0 0.0
    %56 = vmatpush1.msra.mxu0 %v47
    %57 = vmatprep.subr.mxu0 0.0
    %58 = vmatpush1.msra.mxu0 %v48
    %59 = vmatprep.subr.mxu0 0.0
    %60 = vmatpush1.msra.mxu0 %v49
    %61 = vmatprep.subr.mxu0 0.0
    %62 = vmatpush1.msra.mxu0 %v50
    %63 = vmatprep.subr.mxu0 0.0
    %64 = vmatpush1.msra.mxu0 0.0
    %65 = vmatprep.subr.mxu0 0.0
    %66 = vmatpush1.msra.mxu0 0.0
    %67 = vmatprep.subr.mxu0 0.0
    %68 = vmatpush1.msra.mxu0 0.0
    %69 = vmatprep.subr.mxu0 0.0
    %70 = vmatpush1.msra.mxu0 0.0
    %71 = vmatprep.subr.mxu0 0.0
    %72 = vmatpush1.msra.mxu0 0.0
    %73 = vmatprep.subr.mxu0 0.0
    %74 = vmatpush1.msra.mxu0 0.0
    %75 = vmatprep.subr.mxu0 0.0
    %76 = vmatpush1.msra.mxu0 0.0
    %77 = vmatprep.subr.mxu0 0.0
    %78 = vmatpush1.msra.mxu0 0.0
    %79 = vmatprep.subr.mxu0 0.0
    %80 = vmatpush1.msra.mxu0 0.0
    %81 = vmatprep.subr.mxu0 0.0
    %82 = vmatpush1.msra.mxu0 0.0
    %83 = vmatprep.subr.mxu0 0.0
    %84 = vmatpush1.msra.mxu0 0.0
    %85 = vmatprep.subr.mxu0 0.0
    %86 = vmatpush1.msra.mxu0 0.0
    %87 = vmatprep.subr.mxu0 0.0
    %88 = vmatpush1.msra.mxu0 0.0
    %89 = vmatprep.subr.mxu0 0.0
    %90 = vmatpush1.msra.mxu0 0.0
    %91 = vmatprep.subr.mxu0 0.0
    %92 = vmatpush1.msra.mxu0 0.0
    %93 = vmatprep.subr.mxu0 0.0
    %94 = vmatpush1.msra.mxu0 0.0
    %95 = vmatprep.subr.mxu0 0.0
    %96 = vmatpush1.msra.mxu0 0.0
    %97 = vmatprep.subr.mxu0 0.0
    %98 = vmatpush1.msra.mxu0 0.0
    %99 = vmatprep.subr.mxu0 0.0
    %100 = vmatpush1.msra.mxu0 0.0
    %101 = vmatprep.subr.mxu0 0.0
    %102 = vmatpush1.msra.mxu0 0.0
    %103 = vmatprep.subr.mxu0 0.0
    %104 = vmatpush1.msra.mxu0 0.0
    %105 = vmatprep.subr.mxu0 0.0
    %106 = vmatpush1.msra.mxu0 0.0
    %107 = vmatprep.subr.mxu0 0.0
    %108 = vmatpush1.msra.mxu0 0.0
    %109 = vmatprep.subr.mxu0 0.0
    %110 = vmatpush1.msra.mxu0 0.0
    %111 = vmatprep.subr.mxu0 0.0
    %112 = vmatpush1.msra.mxu0 0.0
    %113 = vmatprep.subr.mxu0 0.0
    %114 = vmatpush1.msra.mxu0 0.0
    %115 = vmatprep.subr.mxu0 0.0
    %116 = vmatpush1.msra.mxu0 0.0
    %117 = vmatprep.subr.mxu0 0.0
    %118 = vmatpush1.msra.mxu0 0.0
    %119 = vmatprep.mubr.f32.mxu0 0.0
    %120 = vmatmul.mubr.f32.gmra.mrb[0].mxu0 %v53
    %v121 = vpop.f32.mrb[0].mxu0
    %v122 = vadd.f32 0.0, %v121
    %v123 = vpop.f32.mrb[0].mxu0
    %124 = vdwg.mxu0
    %v126 = vsel %vm51, %v41, 0
    %128 = vmatprep.subr.mxu0 0.0
    %129 = vmatpush1.msra.mxu0 %v42
    %130 = vmatprep.subr.mxu0 0.0
    %131 = vmatpush1.msra.mxu0 %v43
    %132 = vmatprep.subr.mxu0 0.0
    %133 = vmatpush1.msra.mxu0 %v44
    %134 = vmatprep.subr.mxu0 0.0
    %135 = vmatpush1.msra.mxu0 %v45
    %136 = vmatprep.subr.mxu0 0.0
    %137 = vmatpush1.msra.mxu0 0.0
    %138 = vmatprep.subr.mxu0 0.0
    %139 = vmatpush1.msra.mxu0 0.0
    %140 = vmatprep.subr.mxu0 0.0
    %141 = vmatpush1.msra.mxu0 0.0
    %142 = vmatprep.subr.mxu0 0.0
    %143 = vmatpush1.msra.mxu0 0.0
    %144 = vmatprep.subr.mxu0 0.0
    %145 = vmatpush1.msra.mxu0 0.0
    %146 = vmatprep.subr.mxu0 0.0
    %147 = vmatpush1.msra.mxu0 0.0
    %148 = vmatprep.subr.mxu0 0.0
    %149 = vmatpush1.msra.mxu0 0.0
    %150 = vmatprep.subr.mxu0 0.0
    %151 = vmatpush1.msra.mxu0 0.0
    %152 = vmatprep.subr.mxu0 0.0
    %153 = vmatpush1.msra.mxu0 0.0
    %154 = vmatprep.subr.mxu0 0.0
    %155 = vmatpush1.msra.mxu0 0.0
    %156 = vmatprep.subr.mxu0 0.0
    %157 = vmatpush1.msra.mxu0 0.0
    %158 = vmatprep.subr.mxu0 0.0
    %159 = vmatpush1.msra.mxu0 0.0
    %160 = vmatprep.subr.mxu0 0.0
    %161 = vmatpush1.msra.mxu0 0.0
    %162 = vmatprep.subr.mxu0 0.0
    %163 = vmatpush1.msra.mxu0 0.0
    %164 = vmatprep.subr.mxu0 0.0
    %165 = vmatpush1.msra.mxu0 0.0
    %166 = vmatprep.subr.mxu0 0.0
    %167 = vmatpush1.msra.mxu0 0.0
    %168 = vmatprep.subr.mxu0 0.0
    %169 = vmatpush1.msra.mxu0 0.0
    %170 = vmatprep.subr.mxu0 0.0
    %171 = vmatpush1.msra.mxu0 0.0
    %172 = vmatprep.subr.mxu0 0.0
    %173 = vmatpush1.msra.mxu0 0.0
    %174 = vmatprep.subr.mxu0 0.0
    %175 = vmatpush1.msra.mxu0 0.0
    %176 = vmatprep.subr.mxu0 0.0
    %177 = vmatpush1.msra.mxu0 0.0
    %178 = vmatprep.subr.mxu0 0.0
    %179 = vmatpush1.msra.mxu0 0.0
    %180 = vmatprep.subr.mxu0 0.0
    %181 = vmatpush1.msra.mxu0 0.0
    %182 = vmatprep.subr.mxu0 0.0
    %183 = vmatpush1.msra.mxu0 0.0
    %184 = vmatprep.subr.mxu0 0.0
    %185 = vmatpush1.msra.mxu0 0.0
    %186 = vmatprep.subr.mxu0 0.0
    %187 = vmatpush1.msra.mxu0 0.0
    %188 = vmatprep.subr.mxu0 0.0
    %189 = vmatpush1.msra.mxu0 0.0
    %190 = vmatprep.subr.mxu0 0.0
    %191 = vmatpush1.msra.mxu0 0.0
    %192 = vmatprep.mubr.f32.mxu0 0.0
    %193 = vmatmul.mubr.f32.gmra.mrb[0].mxu0 %v126
    %v194 = vpop.f32.mrb[0].mxu0
    %v195 = vadd.f32 %v122, %v194
    %v196 = vpop.f32.mrb[0].mxu0
    %197 = vdwg.mxu0
    %v198 = vld [vmem:[%s4] sm:$0x1]
    %v200 = vlaneseq
    %v201 = vshrl.u32 %v200, 7
    %v202 = vsub.s32 0, %v201
    %v203 = vrot.slane %v198, %v202
    %v205 = vadd.f32 %v195, %v203
    %v206 = vmax.f32 %v205, 0.0
    %v207 = vld [vmem:[#allocation2] sm:$0xff]
    %v208 = vld [vmem:[#allocation2 + $0x8] sm:$0xff]
    %v209 = vld [vmem:[#allocation2 + $0x10] sm:$0xff]
    %v210 = vld [vmem:[#allocation2 + $0x18] sm:$0xff]
    %v211 = vld [vmem:[#allocation2 + $0x20] sm:$0xff]
    %v212 = vld [vmem:[#allocation2 + $0x28] sm:$0xff]
    %v213 = vld [vmem:[#allocation2 + $0x30] sm:$0xff]
    %v214 = vld [vmem:[#allocation2 + $0x38] sm:$0xff]
    %v215 = vld [vmem:[#allocation2 + $0x40] sm:$0xff]
    %v216 = vld [vmem:[#allocation2 + $0x48] sm:$0xff]
    %v217 = vld [vmem:[#allocation2 + $0x50] sm:$0xff]
    %v218 = vld [vmem:[#allocation2 + $0x58] sm:$0xff]
    %v219 = vld [vmem:[#allocation2 + $0x60] sm:$0xff]
    %v220 = vld [vmem:[#allocation2 + $0x68] sm:$0xff]
    %v221 = vld [vmem:[#allocation2 + $0x70] sm:$0xff]
    %v222 = vld [vmem:[#allocation2 + $0x78] sm:$0xff]
    %v223 = vld [vmem:[#allocation2 + $0x80] sm:$0xff]
    %v224 = vld [vmem:[#allocation2 + $0x88] sm:$0xff]
    %v225 = vld [vmem:[#allocation2 + $0x90] sm:$0xff]
    %v226 = vld [vmem:[#allocation2 + $0x98] sm:$0xff]
    %v227 = vld [vmem:[#allocation2 + $0xa0] sm:$0xff]
    %v228 = vld [vmem:[#allocation2 + $0xa8] sm:$0xff]
    %v229 = vld [vmem:[#allocation2 + $0xb0] sm:$0xff]
    %v230 = vld [vmem:[#allocation2 + $0xb8] sm:$0xff]
    %v231 = vld [vmem:[#allocation2 + $0xc0] sm:$0xff]
    %v232 = vld [vmem:[#allocation2 + $0xc8] sm:$0xff]
    %v233 = vld [vmem:[#allocation2 + $0xd0] sm:$0xff]
    %v234 = vld [vmem:[#allocation2 + $0xd8] sm:$0xff]
    %v235 = vld [vmem:[#allocation2 + $0xe0] sm:$0xff]
    %v236 = vld [vmem:[#allocation2 + $0xe8] sm:$0xff]
    %v237 = vld [vmem:[#allocation2 + $0xf0] sm:$0xff]
    %v238 = vld [vmem:[#allocation2 + $0xf8] sm:$0xff]
    %v239 = vld [vmem:[%s6] sm:$0x3]
    %v241 = vlaneseq
    %v242 = vshrl.u32 %v241, 7
    %v243 = vsub.s32 0, %v242
    %v244 = vrot.slane %v239, %v243
    %v245 = vlaneseq
    %v246 = vshrl.u32 %v245, 7
    %v247 = vsub.s32 1, %v246
    %v248 = vrot.slane %v239, %v247
    %251 = vmatprep.subr.mxu0 %v208
    %252 = vmatpush1.msra.mxu0 %v207
    %253 = vmatprep.subr.mxu0 %v210
    %254 = vmatpush1.msra.mxu0 %v209
    %255 = vmatprep.subr.mxu0 %v212
    %256 = vmatpush1.msra.mxu0 %v211
    %257 = vmatprep.subr.mxu0 %v214
    %258 = vmatpush1.msra.mxu0 %v213
    %259 = vmatprep.subr.mxu0 %v216
    %260 = vmatpush1.msra.mxu0 %v215
    %261 = vmatprep.subr.mxu0 %v218
    %262 = vmatpush1.msra.mxu0 %v217
    %263 = vmatprep.subr.mxu0 %v220
    %264 = vmatpush1.msra.mxu0 %v219
    %265 = vmatprep.subr.mxu0 %v222
    %266 = vmatpush1.msra.mxu0 %v221
    %267 = vmatprep.subr.mxu0 %v224
    %268 = vmatpush1.msra.mxu0 %v223
    %269 = vmatprep.subr.mxu0 %v226
    %270 = vmatpush1.msra.mxu0 %v225
    %271 = vmatprep.subr.mxu0 %v228
    %272 = vmatpush1.msra.mxu0 %v227
    %273 = vmatprep.subr.mxu0 %v230
    %274 = vmatpush1.msra.mxu0 %v229
    %275 = vmatprep.subr.mxu0 %v232
    %276 = vmatpush1.msra.mxu0 %v231
    %277 = vmatprep.subr.mxu0 %v234
    %278 = vmatpush1.msra.mxu0 %v233
    %279 = vmatprep.subr.mxu0 %v236
    %280 = vmatpush1.msra.mxu0 %v235
    %281 = vmatprep.subr.mxu0 %v238
    %282 = vmatpush1.msra.mxu0 %v237
    %283 = vmatprep.subr.mxu0 0.0
    %284 = vmatpush1.msra.mxu0 0.0
    %285 = vmatprep.subr.mxu0 0.0
    %286 = vmatpush1.msra.mxu0 0.0
    %287 = vmatprep.subr.mxu0 0.0
    %288 = vmatpush1.msra.mxu0 0.0
    %289 = vmatprep.subr.mxu0 0.0
    %290 = vmatpush1.msra.mxu0 0.0
    %291 = vmatprep.subr.mxu0 0.0
    %292 = vmatpush1.msra.mxu0 0.0
    %293 = vmatprep.subr.mxu0 0.0
    %294 = vmatpush1.msra.mxu0 0.0
    %295 = vmatprep.subr.mxu0 0.0
    %296 = vmatpush1.msra.mxu0 0.0
    %297 = vmatprep.subr.mxu0 0.0
    %298 = vmatpush1.msra.mxu0 0.0
    %299 = vmatprep.subr.mxu0 0.0
    %300 = vmatpush1.msra.mxu0 0.0
    %301 = vmatprep.subr.mxu0 0.0
    %302 = vmatpush1.msra.mxu0 0.0
    %303 = vmatprep.subr.mxu0 0.0
    %304 = vmatpush1.msra.mxu0 0.0
    %305 = vmatprep.subr.mxu0 0.0
    %306 = vmatpush1.msra.mxu0 0.0
    %307 = vmatprep.subr.mxu0 0.0
    %308 = vmatpush1.msra.mxu0 0.0
    %309 = vmatprep.subr.mxu0 0.0
    %310 = vmatpush1.msra.mxu0 0.0
    %311 = vmatprep.subr.mxu0 0.0
    %312 = vmatpush1.msra.mxu0 0.0
    %313 = vmatprep.subr.mxu0 0.0
    %314 = vmatpush1.msra.mxu0 0.0
    %315 = vmatprep.mubr.f32.mxu0 0.0
    %316 = vmatmul.mubr.f32.gmra.mrb[0].mxu0 %v206
    %v317 = vpop.f32.mrb[0].mxu0
    %v318 = vadd.f32 %v244, %v317
    %v319 = vpop.f32.mrb[0].mxu0
    %v320 = vadd.f32 %v248, %v319
    %321 = vdwg.mxu0
    %322 = vst [vmem:[#allocation5] sm:$0xff] %v318
    %323 = vst [vmem:[#allocation5 + $0x8] sm:$0xff] %v320
    // Predicated region
    $region34: #{linear_decoder_forward.1} parent=1 // pred_check
      _
    $region35: #{linear_decoder_forward.1} parent=1 // pred_check_branch
      %325 = sbr.rel (0) target = $region37
    $region36: #{linear_decoder_forward.1} parent=1 // pred_region
      %s327 = ssub.s32 256, 256
      %328 = vsyncadd [#allocation4], %s327
      %s330 = sshll.u32 [#allocation5], 4
      %s331 = int_to_ptr.vmem [resolvable:$true] %s330
      %333 = dma.vmem_to_hbm [thread:$0]  %s331, 256, %s7, [#allocation4]
    $region37: #{linear_decoder_forward.1} parent=1 // pred_fallthru
      _
    // Predicated region
    $region38: #{linear_decoder_forward.1} parent=1 // pred_check
      _
    $region39: #{linear_decoder_forward.1} parent=1 // pred_check_branch
      %335 = sbr.rel (0) target = $region41
    $region40: #{linear_decoder_forward.1} parent=1 // pred_region
      %336 = dma.done [#allocation4], 256
    $region41: #{linear_decoder_forward.1} parent=1 // pred_fallthru
      _
    %337 = vsyncpa [#allocation3], 1
    %338 = vsyncpa [#allocation4], 1

</llo_original>
